<compile_context>
chip_gen: v7x
topology: tpu7x:2x2x1
jax: 0.10.0
libtpu: 0.0.40
codegen_flags: <defaults>
</compile_context>

<pallas_src>
import functools

import jax
import jax.numpy as jnp
from jax.experimental import pallas as pl
from jax.experimental.pallas import tpu as pltpu


# ---------------------------------------------------------------------------
# Kernel
# ---------------------------------------------------------------------------
def _fusion_kernel(w_ref, *refs, n, use_weight):
    # w_ref : (n,) float32 in SMEM (sigmoid(w) * 2/n; unused when !use_weight)
    # refs  : n feature refs of shape (tile_r, tile_l) in VMEM, then the output.
    f_refs = refs[:n]
    o_ref = refs[n]

    # Per-feature load + multiply-accumulate: constant vreg live range
    # (acc + one feature tile); n is small & static so the loop unrolls.
    f0 = f_refs[0][...].astype(jnp.float32)
    acc = f0 * w_ref[0] if use_weight else f0
    for i in range(1, n):
        fi = f_refs[i][...].astype(jnp.float32)
        acc = acc + (fi * w_ref[i] if use_weight else fi)

    o_ref[...] = acc.astype(o_ref.dtype)  # single lane-dense store


# ---------------------------------------------------------------------------
# Tiling helpers
# ---------------------------------------------------------------------------
def _round_up(x, m):
    return ((x + m - 1) // m) * m


def _vmem_capacity_bytes():
    """Physical VMEM per TensorCore; conservative fallback if unqueryable."""
    try:
        info = pltpu.get_tpu_info()
        cap = getattr(info, "vmem_capacity_bytes", None)
        if cap:
            return int(cap)
    except Exception:
        pass
    return 64 << 20  # v7x per-TC size: safe everywhere


def _fold_factor(rows, lanes, sub):
    """Largest k (power of two) such that folding k rows into the lane axis,
    (rows, lanes) -> (rows//k, k*lanes)  [a free contiguous reshape],
    lane-densifies a small / unaligned spatial dim WITHOUT hurting sublane
    packing (rows//k stays a multiple of the packed sublane count)."""
    if lanes % 128 == 0 and lanes >= 512:
        return 1  # already lane-dense
    best = 1
    for k in (2, 4, 8, 16, 32):
        if rows % k == 0 and (rows // k) % sub == 0 and k * lanes <= 4096:
            best = k
    return best


def _pick_tiles(n_feats, rows, lanes, itemsize, sub, vmem_budget):
    """(8,128)-legal tiles sized for the generation's VMEM budget, with
    balanced lane blocks and a guaranteed >=2-block 'parallel' axis (v7x)."""
    # Lane (last-dim) tile: full dim when modest, else balanced multiples of 128.
    max_lane_tile = 2048
    if lanes <= max_lane_tile:
        tile_l = lanes
    else:
        n_lane_blocks = pl.cdiv(lanes, max_lane_tile)
        tile_l = _round_up(pl.cdiv(lanes, n_lane_blocks), 128)

    # Row (sublane) tile sized so the double-buffered working set
    # (n inputs + 1 output) x 2 buffers fits the VMEM budget.
    bufs = 2 * (n_feats + 1)
    max_rows = max(sub, vmem_budget // (bufs * tile_l * itemsize))
    if rows <= max_rows:
        tile_r = rows
    else:
        tile_r = max(sub, min(1024, (max_rows // sub) * sub))

    # Megacore: if the whole tensor fits in one tile, split one parallel axis
    # into two balanced blocks so both v7x TensorCores get work.
    if tile_r >= rows and tile_l >= lanes:
        if rows >= 2 * sub:
            tile_r = _round_up(pl.cdiv(rows, 2), sub)
        elif lanes >= 2 * 128:
            tile_l = _round_up(pl.cdiv(lanes, 2), 128)
    return tile_r, tile_l


# ---------------------------------------------------------------------------
# Wrapper
# ---------------------------------------------------------------------------
def weighted_feature_fusion(x, outputs, layers, w_param=None, weight=False):
    """Pallas implementation of WeightedFeatureFusion.forward (NCHW)."""
    n = len(layers) + 1
    N, nx, H, W = x.shape
    HW = H * W
    R = N * nx
    itemsize = jnp.dtype(x.dtype).itemsize
    sub = max(8, 32 // itemsize)  # packed sublane multiple: 8 f32 / 16 bf16 / 32 i8

    if weight:
        w = jax.nn.sigmoid(w_param).astype(jnp.float32) * (2.0 / n)
    else:
        w = jnp.zeros((n,), jnp.float32)  # ignored by the kernel (use_weight=False)

    # Lane densification (free contiguous reshape of NCHW).
    k = _fold_factor(R, HW, sub)
    rows, lanes = R // k, k * HW

    # Align every feature to nx channels.  na == nx (the common case) is a free
    # reshape; only mismatched features pay a slice/pad copy.
    # TODO(synk): handle na>nx / na<nx in-kernel (channel-clamped index_map +
    # iota mask) so mismatched features avoid this extra HBM pass.
    feats = [x.reshape(rows, lanes)]
    for i in range(n - 1):
        a = outputs[layers[i]]
        na = a.shape[1]
        if na == nx:
            pass
        elif na > nx:
            a = a[:, :nx]                                            # x + a[:, :nx]
        else:
            a = jnp.pad(a, ((0, 0), (0, nx - na), (0, 0), (0, 0)))   # x[:, :na] += a
        feats.append(a.astype(x.dtype).reshape(rows, lanes))

    # Generation-aware VMEM budget / limit.
    vmem_cap = _vmem_capacity_bytes()
    budget = max(8 << 20, min(48 << 20, (vmem_cap * 3) // 4 - (8 << 20)))
    tile_r, tile_l = _pick_tiles(n, rows, lanes, itemsize, sub, budget)
    grid = (pl.cdiv(rows, tile_r), pl.cdiv(lanes, tile_l))

    working_set = 2 * (n + 1) * tile_r * tile_l * itemsize
    vmem_limit = int(min(vmem_cap, max(working_set + (8 << 20), 16 << 20)))

    cost = pl.CostEstimate(
        flops=(2 * n - 1 if weight else n - 1) * rows * lanes,
        transcendentals=0,
        bytes_accessed=(n + 1) * rows * lanes * itemsize,
    )

    feat_spec = pl.BlockSpec((tile_r, tile_l), lambda r, j: (r, j))

    out = pl.pallas_call(
        functools.partial(_fusion_kernel, n=n, use_weight=weight),
        out_shape=jax.ShapeDtypeStruct((rows, lanes), x.dtype),
        grid_spec=pltpu.PrefetchScalarGridSpec(
            num_scalar_prefetch=0,
            grid=grid,
            in_specs=[pl.BlockSpec(memory_space=pltpu.MemorySpace.SMEM)]  # weights
                     + [feat_spec] * n,                                   # n features
            out_specs=pl.BlockSpec((tile_r, tile_l), lambda r, j: (r, j)),
        ),
        compiler_params=pltpu.CompilerParams(
            dimension_semantics=("parallel", "parallel"),
            vmem_limit_bytes=vmem_limit),
        cost_estimate=cost,
        input_output_aliases={1: 0},  # output aliases x (in-place `x += a` semantics)
    )(w, *feats)

    return out.reshape(N, nx, H, W)


# ---------------------------------------------------------------------------
# Pure-JAX reference (transcription of the PyTorch forward)
# ---------------------------------------------------------------------------
def _reference(x, outputs, layers, w_param, weight):
    n = len(layers) + 1
    if weight:
        w = jax.nn.sigmoid(w_param) * (2.0 / n)
        x = x * w[0]
    nx = x.shape[1]
    for i in range(n - 1):
        a = outputs[layers[i]] * w[i + 1] if weight else outputs[layers[i]]
        na = a.shape[1]
        if nx == na:
            x = x + a
        elif nx > na:
            x = x.at[:, :na].add(a)
        else:
            x = x + a[:, :nx]
    return x


if __name__ == "__main__":
    key = jax.random.PRNGKey(0)
    k0, k1, k2, k3, k4, k5 = jax.random.split(key, 6)

    # --- Test 1: batch=2, channels=4, spatial=16x16, all three channel branches.
    x = jax.random.normal(k0, (2, 4, 16, 16), jnp.float32)
    outputs = [
        jnp.zeros((2, 4, 16, 16), jnp.float32),              # unused slot
        jax.random.normal(k1, (2, 4, 16, 16), jnp.float32),  # nx == na branch
        jax.random.normal(k2, (2, 2, 16, 16), jnp.float32),  # nx >  na branch
        jax.random.normal(k3, (2, 6, 16, 16), jnp.float32),  # nx <  na branch
    ]
    layers = [1, 2, 3]
    n = len(layers) + 1
    w_param = jnp.linspace(-0.5, 0.5, n, dtype=jnp.float32)

    out = jax.block_until_ready(
        weighted_feature_fusion(x, outputs, layers, w_param=w_param, weight=True))
    ref = _reference(x, outputs, layers, w_param, weight=True)
    assert out.shape == ref.shape and out.dtype == ref.dtype
    assert jnp.allclose(out, ref, atol=1e-5, rtol=1e-5)

    # weight=False path.
    out_nw = jax.block_until_ready(
        weighted_feature_fusion(x, outputs, layers, weight=False))
    ref_nw = _reference(x, outputs, layers, None, weight=False)
    assert jnp.allclose(out_nw, ref_nw, atol=1e-5, rtol=1e-5)

    # --- Test 2: YOLO-like odd spatial size (13x13) -> H*W not a multiple of 128.
    x2 = jax.random.normal(k4, (2, 4, 13, 13), jnp.float32)
    outputs2 = [jax.random.normal(k5, (2, 4, 13, 13), jnp.float32)]
    out2 = jax.block_until_ready(
        weighted_feature_fusion(x2, outputs2, [0], weight=False))
    ref2 = _reference(x2, outputs2, [0], None, weight=False)
    assert jnp.allclose(out2, ref2, atol=1e-5, rtol=1e-5)

    # --- Test 3: larger channel count -> lane densification (fold) path.
    k6, k7 = jax.random.split(k5)
    x3 = jax.random.normal(k6, (2, 32, 13, 13), jnp.float32)
    outputs3 = [jax.random.normal(k7, (2, 32, 13, 13), jnp.float32)]
    w3 = jnp.array([0.3, -0.2], jnp.float32)
    out3 = jax.block_until_ready(
        weighted_feature_fusion(x3, outputs3, [0], w_param=w3, weight=True))
    ref3 = _reference(x3, outputs3, [0], w3, weight=True)
    assert jnp.allclose(out3, ref3, atol=1e-5, rtol=1e-5)

    print("KERNEL_OK")
</pallas_src>

<mosaic_0001>
module attributes {stable_mosaic.version = 11 : i64} {
  func.func @_fusion_kernel(%arg0: i32, %arg1: i32, %arg2: memref<4xf32, #tpu.memory_space<smem>>, %arg3: memref<8x128xf32, #tpu.memory_space<vmem>>, %arg4: memref<8x128xf32, #tpu.memory_space<vmem>>, %arg5: memref<8x128xf32, #tpu.memory_space<vmem>>, %arg6: memref<8x128xf32, #tpu.memory_space<vmem>>, %arg7: memref<8x128xf32, #tpu.memory_space<vmem>>) attributes {dimension_semantics = [#tpu.dimension_semantics<parallel>, #tpu.dimension_semantics<parallel>], iteration_bounds = array<i64: 1, 2>, scalar_prefetch = 0 : i64, scratch_operands = 0 : i64, tpu.core_type = #tpu.core_type<tc>, window_params = [{transform_indices = @transform_0, window_bounds = array<i64: 4>}, {transform_indices = @transform_1, window_bounds = array<i64: 8, 128>}, {transform_indices = @transform_2, window_bounds = array<i64: 8, 128>}, {transform_indices = @transform_3, window_bounds = array<i64: 8, 128>}, {transform_indices = @transform_4, window_bounds = array<i64: 8, 128>}, {transform_indices = @transform_5, window_bounds = array<i64: 8, 128>}]} {
    %c0 = arith.constant 0 : index
    %c0_0 = arith.constant 0 : index
    %0 = vector.load %arg3[%c0, %c0_0] : memref<8x128xf32, #tpu.memory_space<vmem>>, vector<8x128xf32>
    %c0_1 = arith.constant 0 : index
    %1 = memref.load %arg2[%c0_1] : memref<4xf32, #tpu.memory_space<smem>>
    %2 = vector.broadcast %1 : f32 to vector<8x128xf32>
    %3 = arith.mulf %0, %2 : vector<8x128xf32>
    %c0_2 = arith.constant 0 : index
    %c0_3 = arith.constant 0 : index
    %4 = vector.load %arg4[%c0_2, %c0_3] : memref<8x128xf32, #tpu.memory_space<vmem>>, vector<8x128xf32>
    %c1 = arith.constant 1 : index
    %5 = memref.load %arg2[%c1] : memref<4xf32, #tpu.memory_space<smem>>
    %6 = vector.broadcast %5 : f32 to vector<8x128xf32>
    %7 = arith.mulf %4, %6 : vector<8x128xf32>
    %8 = arith.addf %3, %7 : vector<8x128xf32>
    %c0_4 = arith.constant 0 : index
    %c0_5 = arith.constant 0 : index
    %9 = vector.load %arg5[%c0_4, %c0_5] : memref<8x128xf32, #tpu.memory_space<vmem>>, vector<8x128xf32>
    %c2 = arith.constant 2 : index
    %10 = memref.load %arg2[%c2] : memref<4xf32, #tpu.memory_space<smem>>
    %11 = vector.broadcast %10 : f32 to vector<8x128xf32>
    %12 = arith.mulf %9, %11 : vector<8x128xf32>
    %13 = arith.addf %8, %12 : vector<8x128xf32>
    %c0_6 = arith.constant 0 : index
    %c0_7 = arith.constant 0 : index
    %14 = vector.load %arg6[%c0_6, %c0_7] : memref<8x128xf32, #tpu.memory_space<vmem>>, vector<8x128xf32>
    %c3 = arith.constant 3 : index
    %15 = memref.load %arg2[%c3] : memref<4xf32, #tpu.memory_space<smem>>
    %16 = vector.broadcast %15 : f32 to vector<8x128xf32>
    %17 = arith.mulf %14, %16 : vector<8x128xf32>
    %18 = arith.addf %13, %17 : vector<8x128xf32>
    %c0_8 = arith.constant 0 : index
    %c0_9 = arith.constant 0 : index
    %19 = vector.load %arg7[%c0_8, %c0_9] : memref<8x128xf32, #tpu.memory_space<vmem>>, vector<8x128xf32>
    tpu.vector_store %arg7[%c0_8, %c0_9], %18 {strides = array<i32>} : memref<8x128xf32, #tpu.memory_space<vmem>>, vector<8x128xf32>,
    return
  }
  func.func @transform_0(%arg0: i32, %arg1: i32) -> i32 {
    %c0_i32 = arith.constant 0 : i32
    %c0_i32_0 = arith.constant 0 : i32
    return %c0_i32 : i32
  }
  func.func @transform_1(%arg0: i32, %arg1: i32) -> (i32, i32) {
    %c0_i32 = arith.constant 0 : i32
    return %arg0, %arg1 : i32, i32
  }
  func.func @transform_2(%arg0: i32, %arg1: i32) -> (i32, i32) {
    %c0_i32 = arith.constant 0 : i32
    return %arg0, %arg1 : i32, i32
  }
  func.func @transform_3(%arg0: i32, %arg1: i32) -> (i32, i32) {
    %c0_i32 = arith.constant 0 : i32
    return %arg0, %arg1 : i32, i32
  }
  func.func @transform_4(%arg0: i32, %arg1: i32) -> (i32, i32) {
    %c0_i32 = arith.constant 0 : i32
    return %arg0, %arg1 : i32, i32
  }
  func.func @transform_5(%arg0: i32, %arg1: i32) -> (i32, i32) {
    %c0_i32 = arith.constant 0 : i32
    return %arg0, %arg1 : i32, i32
  }
}

</mosaic_0001>

<llo_original>
// kernel: tpu_custom_call.1
$region0: #{tpu_custom_call.1}
  #allocation0 [shape = 'u32[]', space=smem, size = 0x4, offset = 0x4, fixed_abs, tag = 'smem constant byte address 0x4 - core index']
  #allocation1 [shape = 'u32[144,128]{1,0:T(1,128)}', space=vmem, size = 0x12000, scoped, tag = 'internal scratch']
  %s0 = inlined_call_operand.vmem [shape: f32[4], index: 0, kind: input, shape index: {}]
  %s1 = inlined_call_operand.hbm [shape: f32[8,256], index: 1, kind: input, shape index: {}, may-alias: {1,5}]
  %s2 = inlined_call_operand.vmem [shape: f32[8,256], index: 2, kind: input, shape index: {}]
  %s3 = inlined_call_operand.vmem [shape: f32[8,256], index: 3, kind: input, shape index: {}]
  %s4 = inlined_call_operand.hbm [shape: f32[8,256], index: 4, kind: input, shape index: {}]
  %s5 = inlined_call_operand.hbm [shape: f32[8,256], index: 5, kind: output, shape index: {}, may-alias: {1,5}]
  %s6 = sld [smem:[#allocation0]]
  $region65: #{tpu_custom_call.1} parent=0
    _
  %s8 = ssub.s32 1, %s6
  %s9 = scalar_select 0, %s8, %s6
  $region1: #{tpu_custom_call.1} parent=0
    #allocation2 [shape = 'u8[512]{0}', space=smem, size = 0x200, scoped, tag = 'input window, operand 0, single buffered']
    #allocation3 [shape = 's32[2]{0}', space=sflag, size = 0x8, scoped, tag = 'scoped memory for tpu_custom_call.1']
    #allocation4 [shape = 's32[2]{0}', space=sflag, size = 0x8, scoped, tag = 'scoped memory for tpu_custom_call.1']
    #allocation5 [shape = 's32[2]{0}', space=sflag, size = 0x8, scoped, tag = 'scoped memory for tpu_custom_call.1']
    #allocation6 [shape = 'u8[8192]{0}', space=vmem, size = 0x2000, scoped, tag = 'input window, operand 1']
    #allocation7 [shape = 'u8[8192]{0}', space=vmem, size = 0x2000, scoped, tag = 'input window, operand 4']
    #allocation8 [shape = 's32[2]{0}', space=sflag, size = 0x8, scoped, tag = 'scoped memory for tpu_custom_call.1']
    #allocation9 [shape = 'u8[8192]{0}', space=vmem, size = 0x2000, scoped, tag = 'output window, operand 0']
    %10 = vsyncpa [#allocation5], 0
    %11 = vsyncpa [#allocation3], 0
    %s12 = scalar_lea.sflag [#allocation3], 1
    %13 = vsyncpa %s12, 0
    %14 = vsyncpa [#allocation8], 0
    %s15 = scalar_lea.sflag [#allocation8], 1
    %16 = vsyncpa %s15, 0
    %17 = vsyncpa [#allocation4], 0
    %s18 = scalar_lea.sflag [#allocation4], 1
    %19 = vsyncpa %s18, 0
    loop: start=0, step=1, limit=4
    $region2: #{tpu_custom_call.1} parent=1 // loop_pre_header
      _
    $region3: #{tpu_custom_call.1} parent=1 // loop_header
      %s21 = sphi 0, %s25
      %p22 = scmp.ge.s32.totalorder %s21, 4
      %s28 = sphi 0, %s40
      %s29 = sphi 0, %s36
      %s30 = sphi 0, %s28
      %s31 = sphi 0, %s29
      %s32 = sphi 0, %s30
      %s33 = sphi 0, %s31
      %s41 = sphi 0, %s41
      %s43 = sphi 0, %s41
      %s44 = sphi 0, %s43
      %s58 = sphi 0, %s44
      %s66 = sphi 0, %s68
      %s69 = sphi 0, %s66
      %s70 = sphi 0, %s69
      %s86 = sphi 0, %s70
      %s94 = sphi 0, %s96
      %s97 = sphi 0, %s94
      %s98 = sphi 0, %s97
      %s114 = sphi 0, %s98
      %s122 = sphi 0, %s124
      %s125 = sphi 0, %s122
      %s126 = sphi 0, %s125
      %s142 = sphi 0, %s126
      %s150 = sphi 0, %s152
      %s153 = sphi 0, %s150
      %s154 = sphi 0, %s153
      %s170 = sphi 0, %s154
      %s178 = sphi 0, %s180
      %s181 = sphi 0, %s178
      %s182 = sphi 0, %s181
      %s198 = sphi 0, %s182
    $region4: #{tpu_custom_call.1} parent=1 // loop_header_branch
      %24 = sbr.rel (%p22) target = $region8
    $region5: #{tpu_custom_call.1} parent=1 // loop_body
      %s26 = ssub.s32 %s21, 1
      %s27 = ssub.s32 %s21, 2
      %s34 = sadd.s32 1, %s29
      %p35 = scmp.ge.s32.totalorder %s34, 2
      %s36 = scalar_select %p35, 0, %s34
      %s37 = sadd.s32 1, %s28
      %s38 = scalar_select %p35, %s37, %s28
      %p39 = scmp.ge.s32.totalorder %s38, 1
      %s40 = scalar_select %p39, 0, %s38
      %s42 = sadd.s32 %s41, 1
      %p45 = scmp.eq.s32.totalorder %s21, 1
      %p46 = scmp.ne.s32.totalorder %s41, %s43
      %p47 = scmp.eq.s32.totalorder %s21, 0
      %p48 = por %p46, %p47
      %p49 = scmp.ne.s32.totalorder %s41, %s43
      %p50 = scmp.eq.s32.totalorder %s26, 1
      %p51 = por %p49, %p50
      %p52 = scmp.ne.s32.totalorder %s43, %s44
      %p53 = scmp.eq.s32.totalorder %s26, 0
      %p54 = por %p52, %p53
      %p55 = scmp.ne.s32.totalorder %s43, %s44
      %p56 = scmp.eq.s32.totalorder %s27, 1
      %p57 = por %p55, %p56
      %p59 = scmp.ne.s32.totalorder %s44, %s58
      %p60 = scmp.eq.s32.totalorder %s27, 0
      %p61 = por %p59, %p60
      %s62 = ssub.s32 %s28, %s40
      %s63 = ssub.s32 %s29, %s36
      %s64 = sor.u32 %s62, %s63
      %p65 = scmp.eq.s32.totalorder %s64, 0
      %s67 = sadd.s32 %s66, 1
      %s68 = scalar_select %p65, %s66, %s67
      %p71 = pneg %p65
      %p72 = scmp.eq.s32.totalorder %s21, 1
      %p73 = por %p71, %p72
      %p74 = scmp.ne.s32.totalorder %s66, %s69
      %p75 = scmp.eq.s32.totalorder %s21, 0
      %p76 = por %p74, %p75
      %p77 = scmp.ne.s32.totalorder %s66, %s69
      %p78 = scmp.eq.s32.totalorder %s26, 1
      %p79 = por %p77, %p78
      %p80 = scmp.ne.s32.totalorder %s69, %s70
      %p81 = scmp.eq.s32.totalorder %s26, 0
      %p82 = por %p80, %p81
      %p83 = scmp.ne.s32.totalorder %s69, %s70
      %p84 = scmp.eq.s32.totalorder %s27, 1
      %p85 = por %p83, %p84
      %p87 = scmp.ne.s32.totalorder %s70, %s86
      %p88 = scmp.eq.s32.totalorder %s27, 0
      %p89 = por %p87, %p88
      %s90 = ssub.s32 %s28, %s40
      %s91 = ssub.s32 %s29, %s36
      %s92 = sor.u32 %s90, %s91
      %p93 = scmp.eq.s32.totalorder %s92, 0
      %s95 = sadd.s32 %s94, 1
      %s96 = scalar_select %p93, %s94, %s95
      %p99 = pneg %p93
      %p100 = scmp.eq.s32.totalorder %s21, 1
      %p101 = por %p99, %p100
      %p102 = scmp.ne.s32.totalorder %s94, %s97
      %p103 = scmp.eq.s32.totalorder %s21, 0
      %p104 = por %p102, %p103
      %p105 = scmp.ne.s32.totalorder %s94, %s97
      %p106 = scmp.eq.s32.totalorder %s26, 1
      %p107 = por %p105, %p106
      %p108 = scmp.ne.s32.totalorder %s97, %s98
      %p109 = scmp.eq.s32.totalorder %s26, 0
      %p110 = por %p108, %p109
      %p111 = scmp.ne.s32.totalorder %s97, %s98
      %p112 = scmp.eq.s32.totalorder %s27, 1
      %p113 = por %p111, %p112
      %p115 = scmp.ne.s32.totalorder %s98, %s114
      %p116 = scmp.eq.s32.totalorder %s27, 0
      %p117 = por %p115, %p116
      %s118 = ssub.s32 %s28, %s40
      %s119 = ssub.s32 %s29, %s36
      %s120 = sor.u32 %s118, %s119
      %p121 = scmp.eq.s32.totalorder %s120, 0
      %s123 = sadd.s32 %s122, 1
      %s124 = scalar_select %p121, %s122, %s123
      %p127 = pneg %p121
      %p128 = scmp.eq.s32.totalorder %s21, 1
      %p129 = por %p127, %p128
      %p130 = scmp.ne.s32.totalorder %s122, %s125
      %p131 = scmp.eq.s32.totalorder %s21, 0
      %p132 = por %p130, %p131
      %p133 = scmp.ne.s32.totalorder %s122, %s125
      %p134 = scmp.eq.s32.totalorder %s26, 1
      %p135 = por %p133, %p134
      %p136 = scmp.ne.s32.totalorder %s125, %s126
      %p137 = scmp.eq.s32.totalorder %s26, 0
      %p138 = por %p136, %p137
      %p139 = scmp.ne.s32.totalorder %s125, %s126
      %p140 = scmp.eq.s32.totalorder %s27, 1
      %p141 = por %p139, %p140
      %p143 = scmp.ne.s32.totalorder %s126, %s142
      %p144 = scmp.eq.s32.totalorder %s27, 0
      %p145 = por %p143, %p144
      %s146 = ssub.s32 %s28, %s40
      %s147 = ssub.s32 %s29, %s36
      %s148 = sor.u32 %s146, %s147
      %p149 = scmp.eq.s32.totalorder %s148, 0
      %s151 = sadd.s32 %s150, 1
      %s152 = scalar_select %p149, %s150, %s151
      %p155 = pneg %p149
      %p156 = scmp.eq.s32.totalorder %s21, 1
      %p157 = por %p155, %p156
      %p158 = scmp.ne.s32.totalorder %s150, %s153
      %p159 = scmp.eq.s32.totalorder %s21, 0
      %p160 = por %p158, %p159
      %p161 = scmp.ne.s32.totalorder %s150, %s153
      %p162 = scmp.eq.s32.totalorder %s26, 1
      %p163 = por %p161, %p162
      %p164 = scmp.ne.s32.totalorder %s153, %s154
      %p165 = scmp.eq.s32.totalorder %s26, 0
      %p166 = por %p164, %p165
      %p167 = scmp.ne.s32.totalorder %s153, %s154
      %p168 = scmp.eq.s32.totalorder %s27, 1
      %p169 = por %p167, %p168
      %p171 = scmp.ne.s32.totalorder %s154, %s170
      %p172 = scmp.eq.s32.totalorder %s27, 0
      %p173 = por %p171, %p172
      %s174 = ssub.s32 %s28, %s40
      %s175 = ssub.s32 %s29, %s36
      %s176 = sor.u32 %s174, %s175
      %p177 = scmp.eq.s32.totalorder %s176, 0
      %s179 = sadd.s32 %s178, 1
      %s180 = scalar_select %p177, %s178, %s179
      %p183 = pneg %p177
      %p184 = scmp.eq.s32.totalorder %s21, 1
      %p185 = por %p183, %p184
      %p186 = scmp.ne.s32.totalorder %s178, %s181
      %p187 = scmp.eq.s32.totalorder %s21, 0
      %p188 = por %p186, %p187
      %p189 = scmp.ne.s32.totalorder %s178, %s181
      %p190 = scmp.eq.s32.totalorder %s26, 1
      %p191 = por %p189, %p190
      %p192 = scmp.ne.s32.totalorder %s181, %s182
      %p193 = scmp.eq.s32.totalorder %s26, 0
      %p194 = por %p192, %p193
      %p195 = scmp.ne.s32.totalorder %s181, %s182
      %p196 = scmp.eq.s32.totalorder %s27, 1
      %p197 = por %p195, %p196
      %p199 = scmp.ne.s32.totalorder %s182, %s198
      %p200 = scmp.eq.s32.totalorder %s27, 0
      %p201 = por %p199, %p200
      %p202 = scmp.le.s32.totalorder 1, %s21
      %p203 = scmp.lt.s32.totalorder %s21, 3
      %p204 = pnand %p202, %p203
      %p205 = pneg %p204
      // Predicated region
      $region9: #{tpu_custom_call.1} parent=5 // pred_check
        _
      $region10: #{tpu_custom_call.1} parent=5 // pred_check_branch
        %207 = sbr.rel (%p204) target = $region12
      $region11: #{tpu_custom_call.1} parent=5 // pred_region
        %s208 = ssub.s32 %s21, 1
        // Predicated region
        $region13: #{tpu_custom_call.1} parent=11 // pred_check
          %p209 = pneg %p54
        $region14: #{tpu_custom_call.1} parent=11 // pred_check_branch
          %211 = sbr.rel (%p209) target = $region16
        $region15: #{tpu_custom_call.1} parent=11 // pred_region
          %s213 = ssub.s32 16, 16
          %214 = vsyncadd [#allocation5], %s213
          %s216 = sshll.u32 %s0, 4
          %s217 = int_to_ptr.vmem [resolvable:$true] %s216
          %219 = dma.vmem_to_smem %s217, 16, [#allocation2], [#allocation5]
        $region16: #{tpu_custom_call.1} parent=11 // pred_fallthru
          _
      $region12: #{tpu_custom_call.1} parent=5 // pred_fallthru
        _
      %p220 = scmp.lt.s32.totalorder %s21, 2
      // Predicated region
      $region17: #{tpu_custom_call.1} parent=5 // pred_check
        %p221 = pneg %p220
      $region18: #{tpu_custom_call.1} parent=5 // pred_check_branch
        %223 = sbr.rel (%p221) target = $region20
      $region19: #{tpu_custom_call.1} parent=5 // pred_region
        // Predicated region
        $region21: #{tpu_custom_call.1} parent=19 // pred_check
          %p224 = pneg %p76
        $region22: #{tpu_custom_call.1} parent=19 // pred_check_branch
          %226 = sbr.rel (%p224) target = $region24
        $region23: #{tpu_custom_call.1} parent=19 // pred_region
          %s227 = sand.u32 %s66, 1
          %s228 = scalar_lea.sflag [#allocation3], %s227
          %s229 = sand.u32 %s66, 1
          %s230 = smul.addr %s229, 8
          %s231 = scalar_lea.vmem [#allocation6], %s230
          %s233 = ssub.s32 128, 128
          %234 = vsyncadd %s228, %s233
          %s235 = smul.addr %s28, 2
          %s236 = sadd.s32 %s29, %s235
          %s237 = smul.addr %s236, 128
          %s238 = scalar_lea.hbm %s1, %s237
          %s240 = sshll.u32 %s231, 4
          %s241 = int_to_ptr.vmem [resolvable:$true] %s240
          %243 = dma.hbm_to_vmem [thread:$0]  %s238, 128, %s241, %s228
        $region24: #{tpu_custom_call.1} parent=19 // pred_fallthru
          _
        // Predicated region
        $region25: #{tpu_custom_call.1} parent=19 // pred_check
          %p244 = pneg %p104
        $region26: #{tpu_custom_call.1} parent=19 // pred_check_branch
          %246 = sbr.rel (%p244) target = $region28
        $region27: #{tpu_custom_call.1} parent=19 // pred_region
          %p247 = scmp.lt.s32.totalorder %s28, 0
          %s248 = scalar_select %p247, %s28, 0
          %p249 = scmp.lt.s32.totalorder %s29, 1
          %s250 = scalar_select %p249, %s29, 1
          %s251 = smul.addr %s248, 2
          %s252 = sadd.s32 %s250, %s251
          %s253 = smul.addr %s252, 8
          %s254 = scalar_lea.vmem %s2, %s253
        $region28: #{tpu_custom_call.1} parent=19 // pred_fallthru
          _
        // Predicated region
        $region29: #{tpu_custom_call.1} parent=19 // pred_check
          %p255 = pneg %p132
        $region30: #{tpu_custom_call.1} parent=19 // pred_check_branch
          %257 = sbr.rel (%p255) target = $region32
        $region31: #{tpu_custom_call.1} parent=19 // pred_region
          %p258 = scmp.lt.s32.totalorder %s28, 0
          %s259 = scalar_select %p258, %s28, 0
          %p260 = scmp.lt.s32.totalorder %s29, 1
          %s261 = scalar_select %p260, %s29, 1
          %s262 = smul.addr %s259, 2
          %s263 = sadd.s32 %s261, %s262
          %s264 = smul.addr %s263, 8
          %s265 = scalar_lea.vmem %s3, %s264
        $region32: #{tpu_custom_call.1} parent=19 // pred_fallthru
          _
        // Predicated region
        $region33: #{tpu_custom_call.1} parent=19 // pred_check
          %p266 = pneg %p160
        $region34: #{tpu_custom_call.1} parent=19 // pred_check_branch
          %268 = sbr.rel (%p266) target = $region36
        $region35: #{tpu_custom_call.1} parent=19 // pred_region
          %s269 = sand.u32 %s150, 1
          %s270 = scalar_lea.sflag [#allocation8], %s269
          %s271 = sand.u32 %s150, 1
          %s272 = smul.addr %s271, 8
          %s273 = scalar_lea.vmem [#allocation7], %s272
          %s275 = ssub.s32 128, 128
          %276 = vsyncadd %s270, %s275
          %s277 = smul.addr %s28, 2
          %s278 = sadd.s32 %s29, %s277
          %s279 = smul.addr %s278, 128
          %s280 = scalar_lea.hbm %s4, %s279
          %s282 = sshll.u32 %s273, 4
          %s283 = int_to_ptr.vmem [resolvable:$true] %s282
          %285 = dma.hbm_to_vmem [thread:$0]  %s280, 128, %s283, %s270
        $region36: #{tpu_custom_call.1} parent=19 // pred_fallthru
          _
      $region20: #{tpu_custom_call.1} parent=5 // pred_fallthru
        _
      %p286 = scmp.le.s32.totalorder 1, %s21
      %p287 = scmp.lt.s32.totalorder %s21, 3
      %p288 = pnand %p286, %p287
      %p289 = pneg %p288
      // Predicated region
      $region37: #{tpu_custom_call.1} parent=5 // pred_check
        _
      $region38: #{tpu_custom_call.1} parent=5 // pred_check_branch
        %291 = sbr.rel (%p288) target = $region40
      $region39: #{tpu_custom_call.1} parent=5 // pred_region
        %s292 = ssub.s32 %s21, 1
        // Predicated region
        $region41: #{tpu_custom_call.1} parent=39 // pred_check
          %p293 = pneg %p54
        $region42: #{tpu_custom_call.1} parent=39 // pred_check_branch
          %295 = sbr.rel (%p293) target = $region44
        $region43: #{tpu_custom_call.1} parent=39 // pred_region
          %296 = dma.done [#allocation5], 16
        $region44: #{tpu_custom_call.1} parent=39 // pred_fallthru
          _
        %s297 = sand.u32 %s69, 1
        %s298 = scalar_lea.sflag [#allocation3], %s297
        %s299 = sand.u32 %s69, 1
        %s300 = smul.addr %s299, 8
        %s301 = scalar_lea.vmem [#allocation6], %s300
        // Predicated region
        $region45: #{tpu_custom_call.1} parent=39 // pred_check
          %p302 = pneg %p82
        $region46: #{tpu_custom_call.1} parent=39 // pred_check_branch
          %304 = sbr.rel (%p302) target = $region48
        $region47: #{tpu_custom_call.1} parent=39 // pred_region
          %305 = dma.done %s298, 128
        $region48: #{tpu_custom_call.1} parent=39 // pred_fallthru
          _
        %s306 = sand.u32 %s153, 1
        %s307 = scalar_lea.sflag [#allocation8], %s306
        %s308 = sand.u32 %s153, 1
        %s309 = smul.addr %s308, 8
        %s310 = scalar_lea.vmem [#allocation7], %s309
        // Predicated region
        $region49: #{tpu_custom_call.1} parent=39 // pred_check
          %p311 = pneg %p166
        $region50: #{tpu_custom_call.1} parent=39 // pred_check_branch
          %313 = sbr.rel (%p311) target = $region52
        $region51: #{tpu_custom_call.1} parent=39 // pred_region
          %314 = dma.done %s307, 128
        $region52: #{tpu_custom_call.1} parent=39 // pred_fallthru
          _
        %315 = sfence
        %p316 = pneg %p54
        %p317 = pneg %p51
        %s318 = sand.u32 %s69, 1
        %s319 = scalar_lea.sflag [#allocation3], %s318
        %s320 = sand.u32 %s69, 1
        %s321 = smul.addr %s320, 8
        %s322 = scalar_lea.vmem [#allocation6], %s321
        %p323 = pneg %p82
        %p324 = pneg %p79
        %p325 = scmp.lt.s32.totalorder %s30, 0
        %s326 = scalar_select %p325, %s30, 0
        %p327 = scmp.lt.s32.totalorder %s31, 1
        %s328 = scalar_select %p327, %s31, 1
        %s329 = smul.addr %s326, 2
        %s330 = sadd.s32 %s328, %s329
        %s331 = smul.addr %s330, 8
        %s332 = scalar_lea.vmem %s2, %s331
        %p333 = pneg %p110
        %p334 = pneg %p107
        %p335 = scmp.lt.s32.totalorder %s30, 0
        %s336 = scalar_select %p335, %s30, 0
        %p337 = scmp.lt.s32.totalorder %s31, 1
        %s338 = scalar_select %p337, %s31, 1
        %s339 = smul.addr %s336, 2
        %s340 = sadd.s32 %s338, %s339
        %s341 = smul.addr %s340, 8
        %s342 = scalar_lea.vmem %s3, %s341
        %p343 = pneg %p138
        %p344 = pneg %p135
        %s345 = sand.u32 %s153, 1
        %s346 = scalar_lea.sflag [#allocation8], %s345
        %s347 = sand.u32 %s153, 1
        %s348 = smul.addr %s347, 8
        %s349 = scalar_lea.vmem [#allocation7], %s348
        %p350 = pneg %p166
        %p351 = pneg %p163
        %p352 = pneg %p194
        %p353 = pneg %p191
        %s354 = sand.u32 %s181, 1
        %s355 = scalar_lea.sflag [#allocation4], %s354
        %s356 = sand.u32 %s181, 1
        %s357 = smul.addr %s356, 8
        %s358 = scalar_lea.vmem [#allocation9], %s357
        %p359 = scmp.lt.s32.totalorder %s30, 0
        %s360 = scalar_select %p359, %s30, 0
        %p361 = scmp.lt.s32.totalorder %s31, 1
        %s362 = scalar_select %p361, %s31, 1
        %s363 = smul.addr %s360, 2
        %s364 = sadd.s32 %s362, %s363
        %s365 = smul.addr %s364, 8
        %s366 = scalar_lea.vmem %s2, %s365
        %p367 = scmp.lt.s32.totalorder %s30, 0
        %s368 = scalar_select %p367, %s30, 0
        %p369 = scmp.lt.s32.totalorder %s31, 1
        %s370 = scalar_select %p369, %s31, 1
        %s371 = smul.addr %s368, 2
        %s372 = sadd.s32 %s370, %s371
        %s373 = smul.addr %s372, 8
        %s374 = scalar_lea.vmem %s3, %s373
        %v375 = vld [vmem:[%s301] sm:$0xff]
        %s376 = sld [smem:[#allocation2]]
        %v377 = vstv %s376
        %v378 = vmul.f32 %v375, %v377
        %v379 = vld [vmem:[%s366] sm:$0xff]
        %s380 = sld [smem:[#allocation2 + $0x1]]
        %v381 = vstv %s380
        %v382 = vmul.f32 %v379, %v381
        %v383 = vadd.f32 %v378, %v382
        %v384 = vld [vmem:[%s374] sm:$0xff]
        %s385 = sld [smem:[#allocation2 + $0x2]]
        %v386 = vstv %s385
        %v387 = vmul.f32 %v384, %v386
        %v388 = vadd.f32 %v383, %v387
        %v389 = vld [vmem:[%s310] sm:$0xff]
        %s390 = sld [smem:[#allocation2 + $0x3]]
        %v391 = vstv %s390
        %v392 = vmul.f32 %v389, %v391
        %v393 = vadd.f32 %v388, %v392
        %394 = vst [vmem:[%s358] sm:$0xff] %v393
        %s395 = sand.u32 %s181, 1
        %s396 = scalar_lea.sflag [#allocation4], %s395
        %s397 = sand.u32 %s181, 1
        %s398 = smul.addr %s397, 8
        %s399 = scalar_lea.vmem [#allocation9], %s398
        // Predicated region
        $region53: #{tpu_custom_call.1} parent=39 // pred_check
          %p400 = pneg %p191
        $region54: #{tpu_custom_call.1} parent=39 // pred_check_branch
          %402 = sbr.rel (%p400) target = $region56
        $region55: #{tpu_custom_call.1} parent=39 // pred_region
          %s404 = ssub.s32 128, 128
          %405 = vsyncadd %s396, %s404
          %s406 = smul.addr %s30, 2
          %s407 = sadd.s32 %s31, %s406
          %s408 = smul.addr %s407, 128
          %s409 = scalar_lea.hbm %s5, %s408
          %s411 = sshll.u32 %s399, 4
          %s412 = int_to_ptr.vmem [resolvable:$true] %s411
          %414 = dma.vmem_to_hbm [thread:$0]  %s412, 128, %s409, %s396
        $region56: #{tpu_custom_call.1} parent=39 // pred_fallthru
          _
      $region40: #{tpu_custom_call.1} parent=5 // pred_fallthru
        _
      %p415 = scmp.le.s32.totalorder 2, %s21
      // Predicated region
      $region57: #{tpu_custom_call.1} parent=5 // pred_check
        %p416 = pneg %p415
      $region58: #{tpu_custom_call.1} parent=5 // pred_check_branch
        %418 = sbr.rel (%p416) target = $region60
      $region59: #{tpu_custom_call.1} parent=5 // pred_region
        %s419 = ssub.s32 %s21, 2
        // Predicated region
        $region61: #{tpu_custom_call.1} parent=59 // pred_check
          %p420 = pneg %p197
        $region62: #{tpu_custom_call.1} parent=59 // pred_check_branch
          %422 = sbr.rel (%p420) target = $region64
        $region63: #{tpu_custom_call.1} parent=59 // pred_region
          %s423 = sand.u32 %s182, 1
          %s424 = scalar_lea.sflag [#allocation4], %s423
          %s425 = sand.u32 %s182, 1
          %s426 = smul.addr %s425, 8
          %s427 = scalar_lea.vmem [#allocation9], %s426
          %428 = dma.done %s424, 128
        $region64: #{tpu_custom_call.1} parent=59 // pred_fallthru
          _
      $region60: #{tpu_custom_call.1} parent=5 // pred_fallthru
        _
    $region6: #{tpu_custom_call.1} parent=1 // loop_footer
      %s25 = sadd.s32 1, %s21
    $region7: #{tpu_custom_call.1} parent=1 // loop_footer_branch
      %20 = sbr.rel target = $region3
    $region8: #{tpu_custom_call.1} parent=1 // loop_exit
      _
    %429 = vsyncpa [#allocation3], 1
    %s430 = scalar_lea.sflag [#allocation3], 1
    %431 = vsyncpa %s430, 1
    %432 = vsyncpa [#allocation8], 1
    %s433 = scalar_lea.sflag [#allocation8], 1
    %434 = vsyncpa %s433, 1
    %435 = vsyncpa [#allocation4], 1
    %s436 = scalar_lea.sflag [#allocation4], 1
    %437 = vsyncpa %s436, 1
    %438 = vsyncpa [#allocation5], 1
    %s439 = scalar_lea.sflag [#allocation5], 1
    %440 = vsyncpa %s439, 1

</llo_original>
